<compile_context>
chip_gen: v5e
topology: v5e:2x2
jax: 0.10.0
libtpu: 0.0.40
codegen_flags: <defaults>
</compile_context>

<pallas_src>
import jax
import jax.numpy as jnp
from jax import lax
from jax.experimental import pallas as pl
from jax.experimental.pallas import tpu as pltpu


# ----------------------------------------------------------------------------
# Kernel 1: fused permute_qk + apply_rotary_pos_emb + undo_permute_qk.
# ----------------------------------------------------------------------------
def _fused_rope_qk_kernel(pos_ref, inv_ref, q_ref, k_ref, qo_ref, ko_ref):
    # pos_ref : (1, TS, 1)  f32  positions (already % mini_batch_size)
    # inv_ref : (1, HD)     f32  pair-interleaved inv_freq tiled across heads
    # q/k/qo/ko_ref : (1, TS, HD) activation dtype
    pos = pos_ref[0]                        # (TS, 1)
    inv = inv_ref[...]                      # (1, HD)
    ang = pos * inv                         # (TS, HD) lane-dense outer product
    cos = jnp.cos(ang)
    sin = jnp.sin(ang)

    ts, hd = ang.shape
    lane = lax.broadcasted_iota(jnp.int32, (ts, hd), 1)
    is_even = (lane & 1) == 0               # pair structure never crosses heads
    sin_s = jnp.where(is_even, -sin, sin)   # even lanes: -sin ; odd lanes: +sin

    def pair_swap(x):
        # x[..., 2j] <-> x[..., 2j+1] via two XLU lane rotations + one select.
        x_m1 = pltpu.roll(x, shift=1, axis=1)        # x[i-1]
        x_p1 = pltpu.roll(x, shift=hd - 1, axis=1)   # x[i+1]
        return jnp.where(is_even, x_p1, x_m1)

    q = q_ref[0].astype(jnp.float32)
    k = k_ref[0].astype(jnp.float32)
    # out[2j]   = q[2j]*cos - q[2j+1]*sin ; out[2j+1] = q[2j+1]*cos + q[2j]*sin
    qo_ref[0] = (q * cos + pair_swap(q) * sin_s).astype(qo_ref.dtype)
    ko_ref[0] = (k * cos + pair_swap(k) * sin_s).astype(ko_ref.dtype)


def fused_rope_qk(xq, xk, position_ids, *, num_heads, head_dim,
                  mini_batch_size, base=10000.0, seq_tile=256):
    """Fused permute_qk -> apply_rotary_pos_emb -> undo_permute_qk.

    xq, xk:       (B, L, num_heads*head_dim) — q_proj/k_proj output layout.
    position_ids: (B, L) integer positions (the % mini_batch_size is applied
                  here, matching TTTBase.forward's call site).
    Returns rotated (xq, xk) with identical shape/dtype.
    """
    B, L, HD = xq.shape
    assert HD == num_heads * head_dim and head_dim % 2 == 0
    assert xk.shape == xq.shape

    # inv_freq[j] = base**(-2j/D); interleave per pair and tile across heads so
    # the kernel constant is a single lane-dense (1, HD) row.
    inv_half = 1.0 / (base ** (jnp.arange(0, head_dim, 2, dtype=jnp.float32) / head_dim))
    inv_il = jnp.repeat(inv_half, 2)                        # [f0,f0,f1,f1,...]
    inv_full = jnp.tile(inv_il, num_heads).reshape(1, HD)

    pos = (position_ids % mini_batch_size).astype(jnp.float32).reshape(B, L, 1)

    ts = L if L <= seq_tile else seq_tile
    grid = (B, pl.cdiv(L, ts))

    qk_spec = pl.BlockSpec((1, ts, HD), lambda b, s: (b, s, 0))
    out_shape = (jax.ShapeDtypeStruct(xq.shape, xq.dtype),
                 jax.ShapeDtypeStruct(xk.shape, xk.dtype))

    return pl.pallas_call(
        _fused_rope_qk_kernel,
        out_shape=out_shape,
        grid=grid,
        in_specs=[
            pl.BlockSpec((1, ts, 1), lambda b, s: (b, s, 0)),   # positions
            pl.BlockSpec((1, HD), lambda b, s: (0, 0)),          # inv_freq const
            qk_spec,                                             # XQ
            qk_spec,                                             # XK
        ],
        out_specs=(qk_spec, qk_spec),
        compiler_params=pltpu.CompilerParams(
            dimension_semantics=("parallel", "parallel")),
    )(pos, inv_full, xq, xk)


# ----------------------------------------------------------------------------
# Kernel 2: standalone RotaryEmbedding.forward (cos/sin), kept for parity.
# ----------------------------------------------------------------------------
def _rope_cos_sin_kernel(pos_ref, inv_ref, cos_ref, sin_ref):
    pos = pos_ref[0]                         # (TS, 1)   f32
    ang = pos * inv_ref[...]                 # (TS, dim) f32
    cos_ref[0] = jnp.cos(ang).astype(cos_ref.dtype)
    sin_ref[0] = jnp.sin(ang).astype(sin_ref.dtype)


def rotary_embedding(x, position_ids, *, dim, base=10000.0, seq_tile=512):
    """RotaryEmbedding.forward: (cos, sin), each (B, S, dim), dtype x.dtype."""
    B, S = position_ids.shape
    inv_half = 1.0 / (base ** (jnp.arange(0, dim, 2, dtype=jnp.float32) / dim))
    inv_full = jnp.concatenate([inv_half, inv_half]).reshape(1, dim)  # cat(freqs,freqs)
    pos = position_ids.astype(jnp.float32).reshape(B, S, 1)

    ts = S if S <= seq_tile else seq_tile
    grid = (B, pl.cdiv(S, ts))
    o_spec = pl.BlockSpec((1, ts, dim), lambda b, s: (b, s, 0))
    out_shape = (jax.ShapeDtypeStruct((B, S, dim), x.dtype),
                 jax.ShapeDtypeStruct((B, S, dim), x.dtype))
    return pl.pallas_call(
        _rope_cos_sin_kernel,
        out_shape=out_shape,
        grid=grid,
        in_specs=[pl.BlockSpec((1, ts, 1), lambda b, s: (b, s, 0)),
                  pl.BlockSpec((1, dim), lambda b, s: (0, 0))],
        out_specs=(o_spec, o_spec),
        compiler_params=pltpu.CompilerParams(
            dimension_semantics=("parallel", "parallel")),
    )(pos, inv_full)


# ----------------------------------------------------------------------------
# Pure-JAX reference (transliteration of the torch pipeline).
# ----------------------------------------------------------------------------
def _reference_rope_qk(xq, xk, position_ids, *, num_heads, head_dim,
                       mini_batch_size, base=10000.0):
    B, L, HD = xq.shape
    q = xq.reshape(B, L, num_heads, head_dim).transpose(0, 2, 1, 3)  # (B,H,L,D)
    k = xk.reshape(B, L, num_heads, head_dim).transpose(0, 2, 1, 3)

    pos = (position_ids % mini_batch_size).astype(jnp.float32)
    inv = 1.0 / (base ** (jnp.arange(0, head_dim, 2, dtype=jnp.float32) / head_dim))
    freqs = pos[:, :, None] * inv[None, None, :]
    emb = jnp.concatenate([freqs, freqs], axis=-1)                   # (B,L,D)
    cos = jnp.cos(emb)[:, None, :, :]
    sin = jnp.sin(emb)[:, None, :, :]

    def permute(t):
        return (t.reshape(B, num_heads, L, head_dim // 2, 2)
                 .swapaxes(3, 4).reshape(B, num_heads, L, head_dim))

    def undo(t):
        return (t.reshape(B, num_heads, L, 2, head_dim // 2)
                 .swapaxes(3, 4).reshape(B, num_heads, L, head_dim))

    def rotate_half(t):
        return jnp.concatenate([-t[..., head_dim // 2:], t[..., :head_dim // 2]], -1)

    qp, kp = permute(q), permute(k)
    qe = qp * cos + rotate_half(qp) * sin
    ke = kp * cos + rotate_half(kp) * sin
    qe, ke = undo(qe), undo(ke)
    qe = qe.transpose(0, 2, 1, 3).reshape(B, L, HD)
    ke = ke.transpose(0, 2, 1, 3).reshape(B, L, HD)
    return qe.astype(xq.dtype), ke.astype(xk.dtype)


if __name__ == "__main__":
    key = jax.random.PRNGKey(0)
    kq, kk, kp = jax.random.split(key, 3)

    # Small shapes consistent with TTTBase.forward.
    B, num_heads, head_dim, L = 2, 4, 32, 16
    mini_batch_size = 16
    hidden = num_heads * head_dim                       # 128 -> lane-dense

    xq = jax.random.normal(kq, (B, L, hidden), dtype=jnp.float32)
    xk = jax.random.normal(kk, (B, L, hidden), dtype=jnp.float32)
    position_ids = jax.random.randint(kp, (B, L), 0, 4 * mini_batch_size,
                                      dtype=jnp.int32)

    # Fused permute_qk + rope + undo_permute_qk (single-tile grid).
    q_rot, k_rot = fused_rope_qk(
        xq, xk, position_ids, num_heads=num_heads, head_dim=head_dim,
        mini_batch_size=mini_batch_size)
    q_rot = jax.block_until_ready(q_rot)
    k_rot = jax.block_until_ready(k_rot)

    q_ref, k_ref = _reference_rope_qk(
        xq, xk, position_ids, num_heads=num_heads, head_dim=head_dim,
        mini_batch_size=mini_batch_size)
    assert q_rot.shape == xq.shape and q_rot.dtype == xq.dtype
    assert jnp.allclose(q_rot, q_ref, atol=1e-4, rtol=1e-5)
    assert jnp.allclose(k_rot, k_ref, atol=1e-4, rtol=1e-5)

    # Multi-tile grid path (grid = (B, 2)).
    q2, k2 = fused_rope_qk(
        xq, xk, position_ids, num_heads=num_heads, head_dim=head_dim,
        mini_batch_size=mini_batch_size, seq_tile=8)
    assert jnp.allclose(jax.block_until_ready(q2), q_ref, atol=1e-4, rtol=1e-5)
    assert jnp.allclose(jax.block_until_ready(k2), k_ref, atol=1e-4, rtol=1e-5)

    # Standalone RotaryEmbedding.forward parity (cos/sin only).
    xv = jax.random.normal(kq, (B, num_heads, L, head_dim), dtype=jnp.float32)
    cos, sin = rotary_embedding(xv, position_ids % mini_batch_size, dim=head_dim)
    cos = jax.block_until_ready(cos)
    sin = jax.block_until_ready(sin)
    pos_f = (position_ids % mini_batch_size).astype(jnp.float32)
    inv = 1.0 / (10000.0 ** (jnp.arange(0, head_dim, 2, dtype=jnp.float32) / head_dim))
    emb = jnp.concatenate([pos_f[:, :, None] * inv, pos_f[:, :, None] * inv], -1)
    assert jnp.allclose(cos, jnp.cos(emb), atol=1e-5, rtol=1e-5)
    assert jnp.allclose(sin, jnp.sin(emb), atol=1e-5, rtol=1e-5)

    print("KERNEL_OK")
</pallas_src>

<mosaic_0001>
module attributes {stable_mosaic.version = 11 : i64} {
  func.func @_fused_rope_qk_kernel(%arg0: i32, %arg1: i32, %arg2: memref<1x16x1xf32, #tpu.memory_space<vmem>>, %arg3: memref<1x128xf32, #tpu.memory_space<vmem>>, %arg4: memref<1x16x128xf32, #tpu.memory_space<vmem>>, %arg5: memref<1x16x128xf32, #tpu.memory_space<vmem>>, %arg6: memref<1x16x128xf32, #tpu.memory_space<vmem>>, %arg7: memref<1x16x128xf32, #tpu.memory_space<vmem>>) attributes {dimension_semantics = [#tpu.dimension_semantics<parallel>, #tpu.dimension_semantics<parallel>], iteration_bounds = array<i64: 2, 1>, scalar_prefetch = 0 : i64, scratch_operands = 0 : i64, tpu.core_type = #tpu.core_type<tc>, window_params = [{transform_indices = @transform_0, window_bounds = array<i64: 1, 16, 1>}, {pipeline_mode = #tpu.pipeline_mode<synchronous>, transform_indices = @transform_1, window_bounds = array<i64: 1, 128>}, {transform_indices = @transform_2, window_bounds = array<i64: 1, 16, 128>}, {transform_indices = @transform_3, window_bounds = array<i64: 1, 16, 128>}, {transform_indices = @transform_4, window_bounds = array<i64: 1, 16, 128>}, {transform_indices = @transform_5, window_bounds = array<i64: 1, 16, 128>}]} {
    %c0 = arith.constant 0 : index
    %c0_0 = arith.constant 0 : index
    %c0_1 = arith.constant 0 : index
    %0 = vector.load %arg2[%c0, %c0_0, %c0_1] : memref<1x16x1xf32, #tpu.memory_space<vmem>>, vector<1x16x1xf32>
    %1 = vector.shape_cast %0 : vector<1x16x1xf32> to vector<16x1xf32>
    %c0_2 = arith.constant 0 : index
    %c0_3 = arith.constant 0 : index
    %2 = vector.load %arg3[%c0_2, %c0_3] : memref<1x128xf32, #tpu.memory_space<vmem>>, vector<1x128xf32>
    %3 = vector.broadcast %1 : vector<16x1xf32> to vector<16x128xf32>
    %4 = vector.broadcast %2 : vector<1x128xf32> to vector<16x128xf32>
    %5 = arith.mulf %3, %4 : vector<16x128xf32>
    %6 = math.cos %5 : vector<16x128xf32>
    %7 = math.sin %5 : vector<16x128xf32>
    %8 = tpu.iota {dimensions = array<i32: 1>} : vector<16x128xi32>
    %c1_i32 = arith.constant 1 : i32
    %9 = vector.broadcast %c1_i32 : i32 to vector<16x128xi32>
    %10 = arith.andi %8, %9 : vector<16x128xi32>
    %c0_i32 = arith.constant 0 : i32
    %11 = vector.broadcast %c0_i32 : i32 to vector<16x128xi32>
    %12 = arith.cmpi eq, %10, %11 : vector<16x128xi32>
    %cst = arith.constant 0.000000e+00 : f32
    %13 = vector.broadcast %cst : f32 to vector<16x128xf32>
    %14 = arith.subf %13, %7 : vector<16x128xf32>
    %15 = arith.select %12, %14, %7 : vector<16x128xi1>, vector<16x128xf32>
    %c0_4 = arith.constant 0 : index
    %c0_5 = arith.constant 0 : index
    %c0_6 = arith.constant 0 : index
    %16 = vector.load %arg4[%c0_4, %c0_5, %c0_6] : memref<1x16x128xf32, #tpu.memory_space<vmem>>, vector<1x16x128xf32>
    %17 = vector.shape_cast %16 : vector<1x16x128xf32> to vector<16x128xf32>
    %c0_7 = arith.constant 0 : index
    %c0_8 = arith.constant 0 : index
    %c0_9 = arith.constant 0 : index
    %18 = vector.load %arg5[%c0_7, %c0_8, %c0_9] : memref<1x16x128xf32, #tpu.memory_space<vmem>>, vector<1x16x128xf32>
    %19 = vector.shape_cast %18 : vector<1x16x128xf32> to vector<16x128xf32>
    %20 = arith.mulf %17, %6 : vector<16x128xf32>
    %c1_i32_10 = arith.constant 1 : i32
    %21 = tpu.dynamic_rotate %17 by %c1_i32_10 dim 1 : vector<16x128xf32>, i32 -> vector<16x128xf32>
    %c127_i32 = arith.constant 127 : i32
    %22 = tpu.dynamic_rotate %17 by %c127_i32 dim 1 : vector<16x128xf32>, i32 -> vector<16x128xf32>
    %23 = arith.select %12, %22, %21 : vector<16x128xi1>, vector<16x128xf32>
    %24 = arith.mulf %23, %15 : vector<16x128xf32>
    %25 = arith.addf %20, %24 : vector<16x128xf32>
    %c0_11 = arith.constant 0 : index
    %c0_12 = arith.constant 0 : index
    %c0_13 = arith.constant 0 : index
    %26 = vector.load %arg6[%c0_11, %c0_12, %c0_13] : memref<1x16x128xf32, #tpu.memory_space<vmem>>, vector<1x16x128xf32>
    %27 = vector.shape_cast %26 : vector<1x16x128xf32> to vector<16x128xf32>
    %28 = vector.shape_cast %25 : vector<16x128xf32> to vector<1x16x128xf32>
    tpu.vector_store %arg6[%c0_11, %c0_12, %c0_13], %28 {strides = array<i32>} : memref<1x16x128xf32, #tpu.memory_space<vmem>>, vector<1x16x128xf32>,
    %29 = arith.mulf %19, %6 : vector<16x128xf32>
    %c1_i32_14 = arith.constant 1 : i32
    %30 = tpu.dynamic_rotate %19 by %c1_i32_14 dim 1 : vector<16x128xf32>, i32 -> vector<16x128xf32>
    %c127_i32_15 = arith.constant 127 : i32
    %31 = tpu.dynamic_rotate %19 by %c127_i32_15 dim 1 : vector<16x128xf32>, i32 -> vector<16x128xf32>
    %32 = arith.select %12, %31, %30 : vector<16x128xi1>, vector<16x128xf32>
    %33 = arith.mulf %32, %15 : vector<16x128xf32>
    %34 = arith.addf %29, %33 : vector<16x128xf32>
    %c0_16 = arith.constant 0 : index
    %c0_17 = arith.constant 0 : index
    %c0_18 = arith.constant 0 : index
    %35 = vector.load %arg7[%c0_16, %c0_17, %c0_18] : memref<1x16x128xf32, #tpu.memory_space<vmem>>, vector<1x16x128xf32>
    %36 = vector.shape_cast %35 : vector<1x16x128xf32> to vector<16x128xf32>
    %37 = vector.shape_cast %34 : vector<16x128xf32> to vector<1x16x128xf32>
    tpu.vector_store %arg7[%c0_16, %c0_17, %c0_18], %37 {strides = array<i32>} : memref<1x16x128xf32, #tpu.memory_space<vmem>>, vector<1x16x128xf32>,
    return
  }
  func.func @transform_0(%arg0: i32, %arg1: i32) -> (i32, i32, i32) {
    %c0_i32 = arith.constant 0 : i32
    %c0_i32_0 = arith.constant 0 : i32
    return %arg0, %arg1, %c0_i32 : i32, i32, i32
  }
  func.func @transform_1(%arg0: i32, %arg1: i32) -> (i32, i32) {
    %c0_i32 = arith.constant 0 : i32
    %c0_i32_0 = arith.constant 0 : i32
    %c0_i32_1 = arith.constant 0 : i32
    return %c0_i32, %c0_i32_0 : i32, i32
  }
  func.func @transform_2(%arg0: i32, %arg1: i32) -> (i32, i32, i32) {
    %c0_i32 = arith.constant 0 : i32
    %c0_i32_0 = arith.constant 0 : i32
    return %arg0, %arg1, %c0_i32 : i32, i32, i32
  }
  func.func @transform_3(%arg0: i32, %arg1: i32) -> (i32, i32, i32) {
    %c0_i32 = arith.constant 0 : i32
    %c0_i32_0 = arith.constant 0 : i32
    return %arg0, %arg1, %c0_i32 : i32, i32, i32
  }
  func.func @transform_4(%arg0: i32, %arg1: i32) -> (i32, i32, i32) {
    %c0_i32 = arith.constant 0 : i32
    %c0_i32_0 = arith.constant 0 : i32
    return %arg0, %arg1, %c0_i32 : i32, i32, i32
  }
  func.func @transform_5(%arg0: i32, %arg1: i32) -> (i32, i32, i32) {
    %c0_i32 = arith.constant 0 : i32
    %c0_i32_0 = arith.constant 0 : i32
    return %arg0, %arg1, %c0_i32 : i32, i32, i32
  }
}

</mosaic_0001>

<llo_original>
// kernel: tpu_custom_call.1
$region0: #{tpu_custom_call.1}
  #allocation0 [shape = 'u32[]', space=smem, size = 0x4, offset = 0x4, fixed_abs, tag = 'smem constant byte address 0x4 - core index']
  #allocation1 [shape = 'u32[72,128]{1,0:T(1,128)}', space=vmem, size = 0x9000, scoped, tag = 'internal scratch']
  %s0 = inlined_call_operand.vmem [shape: f32[2,16,1], index: 0, kind: input, shape index: {}]
  %s1 = inlined_call_operand.vmem [shape: f32[1,128], index: 1, kind: input, shape index: {}]
  %s2 = inlined_call_operand.vmem [shape: f32[2,16,128], index: 2, kind: input, shape index: {}]
  %s3 = inlined_call_operand.hbm [shape: f32[2,16,128], index: 3, kind: input, shape index: {}]
  %s4 = inlined_call_operand.hbm [shape: f32[2,16,128], index: 4, kind: output, shape index: {0}]
  %s5 = inlined_call_operand.hbm [shape: f32[2,16,128], index: 5, kind: output, shape index: {1}]
  %6 = xla_tuple %s4, %s5
  %s7 = sld [smem:[#allocation0]]
  $region61: #{tpu_custom_call.1} parent=0
    _
  %s9 = ssub.s32 1, %s7
  %s10 = scalar_select 0, %s9, %s7
  $region1: #{tpu_custom_call.1} parent=0
    #allocation2 [shape = 'u8[16384]{0}', space=vmem, size = 0x4000, scoped, tag = 'input window, operand 3']
    #allocation3 [shape = 's32[2]{0}', space=sflag, size = 0x8, scoped, tag = 'scoped memory for tpu_custom_call.1']
    #allocation4 [shape = 's32[2]{0}', space=sflag, size = 0x8, scoped, tag = 'scoped memory for tpu_custom_call.1']
    #allocation5 [shape = 'u8[16384]{0}', space=vmem, size = 0x4000, scoped, tag = 'output window, operand 0']
    #allocation6 [shape = 'u8[16384]{0}', space=vmem, size = 0x4000, scoped, tag = 'output window, operand 1']
    #allocation7 [shape = 's32[2]{0}', space=sflag, size = 0x8, scoped, tag = 'scoped memory for tpu_custom_call.1']
    %11 = vsyncpa [#allocation3], 0
    %s12 = scalar_lea.sflag [#allocation3], 1
    %13 = vsyncpa %s12, 0
    %14 = vsyncpa [#allocation4], 0
    %s15 = scalar_lea.sflag [#allocation4], 1
    %16 = vsyncpa %s15, 0
    %17 = vsyncpa [#allocation7], 0
    %s18 = scalar_lea.sflag [#allocation7], 1
    %19 = vsyncpa %s18, 0
    loop: start=0, step=1, limit=4
    $region2: #{tpu_custom_call.1} parent=1 // loop_pre_header
      _
    $region3: #{tpu_custom_call.1} parent=1 // loop_header
      %s21 = sphi 0, %s25
      %p22 = scmp.ge.s32.totalorder %s21, 4
      %s28 = sphi 0, %s40
      %s29 = sphi 0, %s36
      %s30 = sphi 0, %s28
      %s31 = sphi 0, %s29
      %s32 = sphi 0, %s30
      %s33 = sphi 0, %s31
      %s45 = sphi 0, %s47
      %s48 = sphi 0, %s45
      %s49 = sphi 0, %s48
      %s65 = sphi 0, %s49
      %s69 = sphi 0, %s69
      %s71 = sphi 0, %s69
      %s72 = sphi 0, %s71
      %s86 = sphi 0, %s72
      %s94 = sphi 0, %s96
      %s97 = sphi 0, %s94
      %s98 = sphi 0, %s97
      %s114 = sphi 0, %s98
      %s122 = sphi 0, %s124
      %s125 = sphi 0, %s122
      %s126 = sphi 0, %s125
      %s142 = sphi 0, %s126
      %s150 = sphi 0, %s152
      %s153 = sphi 0, %s150
      %s154 = sphi 0, %s153
      %s170 = sphi 0, %s154
      %s178 = sphi 0, %s180
      %s181 = sphi 0, %s178
      %s182 = sphi 0, %s181
      %s198 = sphi 0, %s182
    $region4: #{tpu_custom_call.1} parent=1 // loop_header_branch
      %24 = sbr.rel (%p22) target = $region8
    $region5: #{tpu_custom_call.1} parent=1 // loop_body
      %s26 = ssub.s32 %s21, 1
      %s27 = ssub.s32 %s21, 2
      %s34 = sadd.s32 1, %s29
      %p35 = scmp.ge.s32.totalorder %s34, 1
      %s36 = scalar_select %p35, 0, %s34
      %s37 = sadd.s32 1, %s28
      %s38 = scalar_select %p35, %s37, %s28
      %p39 = scmp.ge.s32.totalorder %s38, 2
      %s40 = scalar_select %p39, 0, %s38
      %s41 = ssub.s32 %s28, %s40
      %s42 = ssub.s32 %s29, %s36
      %s43 = sor.u32 %s41, %s42
      %p44 = scmp.eq.s32.totalorder %s43, 0
      %s46 = sadd.s32 %s45, 1
      %s47 = scalar_select %p44, %s45, %s46
      %p50 = pneg %p44
      %p51 = scmp.eq.s32.totalorder %s21, 1
      %p52 = por %p50, %p51
      %p53 = scmp.ne.s32.totalorder %s45, %s48
      %p54 = scmp.eq.s32.totalorder %s21, 0
      %p55 = por %p53, %p54
      %p56 = scmp.ne.s32.totalorder %s45, %s48
      %p57 = scmp.eq.s32.totalorder %s26, 1
      %p58 = por %p56, %p57
      %p59 = scmp.ne.s32.totalorder %s48, %s49
      %p60 = scmp.eq.s32.totalorder %s26, 0
      %p61 = por %p59, %p60
      %p62 = scmp.ne.s32.totalorder %s48, %s49
      %p63 = scmp.eq.s32.totalorder %s27, 1
      %p64 = por %p62, %p63
      %p66 = scmp.ne.s32.totalorder %s49, %s65
      %p67 = scmp.eq.s32.totalorder %s27, 0
      %p68 = por %p66, %p67
      %s70 = sadd.s32 %s69, 1
      %p73 = scmp.eq.s32.totalorder %s21, 1
      %p74 = scmp.ne.s32.totalorder %s69, %s71
      %p75 = scmp.eq.s32.totalorder %s21, 0
      %p76 = por %p74, %p75
      %p77 = scmp.ne.s32.totalorder %s69, %s71
      %p78 = scmp.eq.s32.totalorder %s26, 1
      %p79 = por %p77, %p78
      %p80 = scmp.ne.s32.totalorder %s71, %s72
      %p81 = scmp.eq.s32.totalorder %s26, 0
      %p82 = por %p80, %p81
      %p83 = scmp.ne.s32.totalorder %s71, %s72
      %p84 = scmp.eq.s32.totalorder %s27, 1
      %p85 = por %p83, %p84
      %p87 = scmp.ne.s32.totalorder %s72, %s86
      %p88 = scmp.eq.s32.totalorder %s27, 0
      %p89 = por %p87, %p88
      %s90 = ssub.s32 %s28, %s40
      %s91 = ssub.s32 %s29, %s36
      %s92 = sor.u32 %s90, %s91
      %p93 = scmp.eq.s32.totalorder %s92, 0
      %s95 = sadd.s32 %s94, 1
      %s96 = scalar_select %p93, %s94, %s95
      %p99 = pneg %p93
      %p100 = scmp.eq.s32.totalorder %s21, 1
      %p101 = por %p99, %p100
      %p102 = scmp.ne.s32.totalorder %s94, %s97
      %p103 = scmp.eq.s32.totalorder %s21, 0
      %p104 = por %p102, %p103
      %p105 = scmp.ne.s32.totalorder %s94, %s97
      %p106 = scmp.eq.s32.totalorder %s26, 1
      %p107 = por %p105, %p106
      %p108 = scmp.ne.s32.totalorder %s97, %s98
      %p109 = scmp.eq.s32.totalorder %s26, 0
      %p110 = por %p108, %p109
      %p111 = scmp.ne.s32.totalorder %s97, %s98
      %p112 = scmp.eq.s32.totalorder %s27, 1
      %p113 = por %p111, %p112
      %p115 = scmp.ne.s32.totalorder %s98, %s114
      %p116 = scmp.eq.s32.totalorder %s27, 0
      %p117 = por %p115, %p116
      %s118 = ssub.s32 %s28, %s40
      %s119 = ssub.s32 %s29, %s36
      %s120 = sor.u32 %s118, %s119
      %p121 = scmp.eq.s32.totalorder %s120, 0
      %s123 = sadd.s32 %s122, 1
      %s124 = scalar_select %p121, %s122, %s123
      %p127 = pneg %p121
      %p128 = scmp.eq.s32.totalorder %s21, 1
      %p129 = por %p127, %p128
      %p130 = scmp.ne.s32.totalorder %s122, %s125
      %p131 = scmp.eq.s32.totalorder %s21, 0
      %p132 = por %p130, %p131
      %p133 = scmp.ne.s32.totalorder %s122, %s125
      %p134 = scmp.eq.s32.totalorder %s26, 1
      %p135 = por %p133, %p134
      %p136 = scmp.ne.s32.totalorder %s125, %s126
      %p137 = scmp.eq.s32.totalorder %s26, 0
      %p138 = por %p136, %p137
      %p139 = scmp.ne.s32.totalorder %s125, %s126
      %p140 = scmp.eq.s32.totalorder %s27, 1
      %p141 = por %p139, %p140
      %p143 = scmp.ne.s32.totalorder %s126, %s142
      %p144 = scmp.eq.s32.totalorder %s27, 0
      %p145 = por %p143, %p144
      %s146 = ssub.s32 %s28, %s40
      %s147 = ssub.s32 %s29, %s36
      %s148 = sor.u32 %s146, %s147
      %p149 = scmp.eq.s32.totalorder %s148, 0
      %s151 = sadd.s32 %s150, 1
      %s152 = scalar_select %p149, %s150, %s151
      %p155 = pneg %p149
      %p156 = scmp.eq.s32.totalorder %s21, 1
      %p157 = por %p155, %p156
      %p158 = scmp.ne.s32.totalorder %s150, %s153
      %p159 = scmp.eq.s32.totalorder %s21, 0
      %p160 = por %p158, %p159
      %p161 = scmp.ne.s32.totalorder %s150, %s153
      %p162 = scmp.eq.s32.totalorder %s26, 1
      %p163 = por %p161, %p162
      %p164 = scmp.ne.s32.totalorder %s153, %s154
      %p165 = scmp.eq.s32.totalorder %s26, 0
      %p166 = por %p164, %p165
      %p167 = scmp.ne.s32.totalorder %s153, %s154
      %p168 = scmp.eq.s32.totalorder %s27, 1
      %p169 = por %p167, %p168
      %p171 = scmp.ne.s32.totalorder %s154, %s170
      %p172 = scmp.eq.s32.totalorder %s27, 0
      %p173 = por %p171, %p172
      %s174 = ssub.s32 %s28, %s40
      %s175 = ssub.s32 %s29, %s36
      %s176 = sor.u32 %s174, %s175
      %p177 = scmp.eq.s32.totalorder %s176, 0
      %s179 = sadd.s32 %s178, 1
      %s180 = scalar_select %p177, %s178, %s179
      %p183 = pneg %p177
      %p184 = scmp.eq.s32.totalorder %s21, 1
      %p185 = por %p183, %p184
      %p186 = scmp.ne.s32.totalorder %s178, %s181
      %p187 = scmp.eq.s32.totalorder %s21, 0
      %p188 = por %p186, %p187
      %p189 = scmp.ne.s32.totalorder %s178, %s181
      %p190 = scmp.eq.s32.totalorder %s26, 1
      %p191 = por %p189, %p190
      %p192 = scmp.ne.s32.totalorder %s181, %s182
      %p193 = scmp.eq.s32.totalorder %s26, 0
      %p194 = por %p192, %p193
      %p195 = scmp.ne.s32.totalorder %s181, %s182
      %p196 = scmp.eq.s32.totalorder %s27, 1
      %p197 = por %p195, %p196
      %p199 = scmp.ne.s32.totalorder %s182, %s198
      %p200 = scmp.eq.s32.totalorder %s27, 0
      %p201 = por %p199, %p200
      %p202 = scmp.le.s32.totalorder 1, %s21
      %p203 = scmp.lt.s32.totalorder %s21, 3
      %p204 = pnand %p202, %p203
      %p205 = pneg %p204
      // Predicated region
      $region9: #{tpu_custom_call.1} parent=5 // pred_check
        _
      $region10: #{tpu_custom_call.1} parent=5 // pred_check_branch
        %207 = sbr.rel (%p204) target = $region12
      $region11: #{tpu_custom_call.1} parent=5 // pred_region
        %s208 = ssub.s32 %s21, 1
        // Predicated region
        $region13: #{tpu_custom_call.1} parent=11 // pred_check
          %p209 = pneg %p82
        $region14: #{tpu_custom_call.1} parent=11 // pred_check_branch
          %211 = sbr.rel (%p209) target = $region16
        $region15: #{tpu_custom_call.1} parent=11 // pred_region
          _
        $region16: #{tpu_custom_call.1} parent=11 // pred_fallthru
          _
      $region12: #{tpu_custom_call.1} parent=5 // pred_fallthru
        _
      %p212 = scmp.lt.s32.totalorder %s21, 2
      // Predicated region
      $region17: #{tpu_custom_call.1} parent=5 // pred_check
        %p213 = pneg %p212
      $region18: #{tpu_custom_call.1} parent=5 // pred_check_branch
        %215 = sbr.rel (%p213) target = $region20
      $region19: #{tpu_custom_call.1} parent=5 // pred_region
        // Predicated region
        $region21: #{tpu_custom_call.1} parent=19 // pred_check
          %p216 = pneg %p55
        $region22: #{tpu_custom_call.1} parent=19 // pred_check_branch
          %218 = sbr.rel (%p216) target = $region24
        $region23: #{tpu_custom_call.1} parent=19 // pred_region
          %s219 = smul.u32 2, %s29
          %p220 = scmp.lt.s32.totalorder %s28, 1
          %s221 = scalar_select %p220, %s28, 1
          %p222 = scmp.lt.s32.totalorder %s219, 1
          %s223 = scalar_select %p222, %s219, 1
          %s224 = smul.addr %s221, 2
          %s225 = sadd.s32 %s223, %s224
          %s226 = smul.addr %s225, 8
          %s227 = scalar_lea.vmem %s0, %s226
          %s228 = smul.u32 2, %s29
        $region24: #{tpu_custom_call.1} parent=19 // pred_fallthru
          _
        // Predicated region
        $region25: #{tpu_custom_call.1} parent=19 // pred_check
          %p229 = pneg %p104
        $region26: #{tpu_custom_call.1} parent=19 // pred_check_branch
          %231 = sbr.rel (%p229) target = $region28
        $region27: #{tpu_custom_call.1} parent=19 // pred_region
          %s232 = smul.u32 2, %s29
          %p233 = scmp.lt.s32.totalorder %s28, 1
          %s234 = scalar_select %p233, %s28, 1
          %p235 = scmp.lt.s32.totalorder %s232, 1
          %s236 = scalar_select %p235, %s232, 1
          %s237 = smul.addr %s234, 2
          %s238 = sadd.s32 %s236, %s237
          %s239 = smul.addr %s238, 8
          %s240 = scalar_lea.vmem %s2, %s239
          %s241 = smul.u32 2, %s29
        $region28: #{tpu_custom_call.1} parent=19 // pred_fallthru
          _
        // Predicated region
        $region29: #{tpu_custom_call.1} parent=19 // pred_check
          %p242 = pneg %p132
        $region30: #{tpu_custom_call.1} parent=19 // pred_check_branch
          %244 = sbr.rel (%p242) target = $region32
        $region31: #{tpu_custom_call.1} parent=19 // pred_region
          %s245 = sand.u32 %s122, 1
          %s246 = scalar_lea.sflag [#allocation3], %s245
          %s247 = sand.u32 %s122, 1
          %s248 = smul.addr %s247, 16
          %s249 = scalar_lea.vmem [#allocation2], %s248
          %s250 = smul.u32 2, %s29
          %252 = vsyncadd %s246, 0
          %s253 = smul.addr %s28, 2
          %s254 = sadd.s32 %s250, %s253
          %s255 = smul.addr %s254, 8
          %s256 = scalar_lea.hbm %s3, %s255
          %s257 = sshll.u32 %s256, 4
          %s258 = int_to_ptr.hbm [resolvable:$true] %s257
          %s259 = sshll.u32 %s249, 4
          %s260 = int_to_ptr.vmem [resolvable:$true] %s259
          %265 = dma.hbm_to_vmem [thread:$0]  %s258, 256, %s260, %s246, 128, 128, 8
        $region32: #{tpu_custom_call.1} parent=19 // pred_fallthru
          _
      $region20: #{tpu_custom_call.1} parent=5 // pred_fallthru
        _
      %p266 = scmp.le.s32.totalorder 1, %s21
      %p267 = scmp.lt.s32.totalorder %s21, 3
      %p268 = pnand %p266, %p267
      %p269 = pneg %p268
      // Predicated region
      $region33: #{tpu_custom_call.1} parent=5 // pred_check
        _
      $region34: #{tpu_custom_call.1} parent=5 // pred_check_branch
        %271 = sbr.rel (%p268) target = $region36
      $region35: #{tpu_custom_call.1} parent=5 // pred_region
        %s272 = ssub.s32 %s21, 1
        %s273 = sand.u32 %s125, 1
        %s274 = scalar_lea.sflag [#allocation3], %s273
        %s275 = sand.u32 %s125, 1
        %s276 = smul.addr %s275, 16
        %s277 = scalar_lea.vmem [#allocation2], %s276
        // Predicated region
        $region37: #{tpu_custom_call.1} parent=35 // pred_check
          %p278 = pneg %p138
        $region38: #{tpu_custom_call.1} parent=35 // pred_check_branch
          %280 = sbr.rel (%p278) target = $region40
        $region39: #{tpu_custom_call.1} parent=35 // pred_region
          %282 = dma.done %s274, 256
        $region40: #{tpu_custom_call.1} parent=35 // pred_fallthru
          _
        %s283 = smul.u32 2, %s31
        %p284 = scmp.lt.s32.totalorder %s30, 1
        %s285 = scalar_select %p284, %s30, 1
        %p286 = scmp.lt.s32.totalorder %s283, 1
        %s287 = scalar_select %p286, %s283, 1
        %s288 = smul.addr %s285, 2
        %s289 = sadd.s32 %s287, %s288
        %s290 = smul.addr %s289, 8
        %s291 = scalar_lea.vmem %s0, %s290
        %p292 = pneg %p61
        %p293 = pneg %p58
        %p294 = pneg %p82
        %p295 = pneg %p79
        %s296 = smul.u32 2, %s31
        %p297 = scmp.lt.s32.totalorder %s30, 1
        %s298 = scalar_select %p297, %s30, 1
        %p299 = scmp.lt.s32.totalorder %s296, 1
        %s300 = scalar_select %p299, %s296, 1
        %s301 = smul.addr %s298, 2
        %s302 = sadd.s32 %s300, %s301
        %s303 = smul.addr %s302, 8
        %s304 = scalar_lea.vmem %s2, %s303
        %p305 = pneg %p110
        %p306 = pneg %p107
        %s307 = sand.u32 %s125, 1
        %s308 = scalar_lea.sflag [#allocation3], %s307
        %s309 = sand.u32 %s125, 1
        %s310 = smul.addr %s309, 16
        %s311 = scalar_lea.vmem [#allocation2], %s310
        %p312 = pneg %p138
        %p313 = pneg %p135
        %p314 = pneg %p166
        %p315 = pneg %p163
        %s316 = sand.u32 %s153, 1
        %s317 = scalar_lea.sflag [#allocation4], %s316
        %s318 = sand.u32 %s153, 1
        %s319 = smul.addr %s318, 16
        %s320 = scalar_lea.vmem [#allocation5], %s319
        %p321 = pneg %p194
        %p322 = pneg %p191
        %s323 = sand.u32 %s181, 1
        %s324 = scalar_lea.sflag [#allocation7], %s323
        %s325 = sand.u32 %s181, 1
        %s326 = smul.addr %s325, 16
        %s327 = scalar_lea.vmem [#allocation6], %s326
        %s328 = smul.u32 2, %s31
        %p329 = scmp.lt.s32.totalorder %s30, 1
        %s330 = scalar_select %p329, %s30, 1
        %p331 = scmp.lt.s32.totalorder %s328, 1
        %s332 = scalar_select %p331, %s328, 1
        %s333 = smul.addr %s330, 2
        %s334 = sadd.s32 %s332, %s333
        %s335 = smul.addr %s334, 8
        %s336 = scalar_lea.vmem %s0, %s335
        %s337 = smul.u32 2, %s31
        %s338 = smul.u32 2, %s31
        %p339 = scmp.lt.s32.totalorder %s30, 1
        %s340 = scalar_select %p339, %s30, 1
        %p341 = scmp.lt.s32.totalorder %s338, 1
        %s342 = scalar_select %p341, %s338, 1
        %s343 = smul.addr %s340, 2
        %s344 = sadd.s32 %s342, %s343
        %s345 = smul.addr %s344, 8
        %s346 = scalar_lea.vmem %s2, %s345
        %s347 = smul.u32 2, %s31
        %s348 = smul.u32 2, %s31
        %s349 = smul.u32 2, %s31
        %s350 = smul.u32 2, %s31
        %v351 = vld [vmem:[%s336] sm:$0xff]
        %v352 = vld [vmem:[%s336 + $0x8] sm:$0xff]
        %v353 = vld [vmem:[%s1] sm:$0x1]
        %355 = vset.pattern.permute.xlu0 0
        %356 = vperm.xlu0 %355, %v351
        %v357 = vpop.permute.xlu0 %356
        %360 = vset.pattern.permute.xlu0 0
        %361 = vperm.xlu0 %360, %v352
        %v362 = vpop.permute.xlu0 %361
        %v365 = vperm.slane %v353, 0
        %v367 = vmul.f32 %v357, %v365
        %v368 = vmul.f32 %v362, %v365
        %v369 = vand.u32 2147483647, %v367
        %vm370 = vcmp.le.f32.partialorder %v369, 0.7853982
        %vm371 = vcmp.lt.s32.totalorder %v367, 0
        %v372 = vand.u32 %v367, 2139095040
        %v373 = vshrl.u32 %v372, 23
        %v374 = vsub.s32 %v373, 127
        %v375 = vand.u32 2147483647, %v367
        %v376 = vand.u32 %v375, 8388607
        %v377 = vor.u32 %v376, 8388608
        %v378 = vsub.s32 0, %v377
        %v379 = vadd.s32 %v374, 1
        %vm380 = vcmp.gt.s32.totalorder %v379, 0
        %v381 = vsel %vm380, %v379, 0
        %v382 = vshrl.u32 %v381, 5
        %v383 = vand.u32 %v381, 31
        %v384 = vsub.s32 32, %v383
        %v385 = vshrl.u32 683565275, %v384
        %v386 = vshll.u32 683565275, %v383
        %v387 = vshrl.u32 2475754826, %v384
        %v388 = vor.u32 %v386, %v387
        %v389 = vshll.u32 2475754826, %v383
        %v390 = vshrl.u32 2131351028, %v384
        %v391 = vor.u32 %v389, %v390
        %v392 = vshll.u32 2131351028, %v383
        %v393 = vshrl.u32 2102212464, %v384
        %v394 = vor.u32 %v392, %v393
        %v395 = vshll.u32 2102212464, %v383
        %v396 = vshrl.u32 920167782, %v384
        %v397 = vor.u32 %v395, %v396
        %v398 = vshll.u32 920167782, %v383
        %v399 = vshrl.u32 1326507024, %v384
        %v400 = vor.u32 %v398, %v399
        %vm401 = vcmp.lt.s32.totalorder %v382, 1
        %vm402 = vcmp.lt.s32.totalorder %v382, 2
        %vm403 = vcmp.lt.s32.totalorder %v382, 3
        %vm404 = vcmp.lt.s32.totalorder %v382, 4
        %v405 = vsel %vm401, %v385, %v388
        %v406 = vsel %vm404, %v394, 2102212464
        %v407 = vsel %vm403, %v391, %v406
        %v408 = vsel %vm402, %v405, %v407
        %v409 = vsel %vm401, %v388, %v391
        %v410 = vsel %vm404, %v397, 920167782
        %v411 = vsel %vm403, %v394, %v410
        %v412 = vsel %vm402, %v409, %v411
        %v413 = vsel %vm401, %v391, %v394
        %v414 = vsel %vm404, %v400, 1326507024
        %v415 = vsel %vm403, %v397, %v414
        %v416 = vsel %vm402, %v413, %v415
        %v417 = vshll.u32 %v377, 8
        %v418 = vand.u32 %v417, 65535
        %v419 = vshrl.u32 %v417, 16
        %v420 = vand.u32 %v416, 65535
        %v421 = vshrl.u32 %v416, 16
        %v422 = vmul.u32 %v418, %v420
        %v423 = vmul.u32 %v418, %v421
        %v424 = vmul.u32 %v419, %v420
        %v425 = vmul.u32 %v419, %v421
        %v426 = vshll.u32 %v423, 16
        %v427 = vshrl.u32 %v423, 16
        %v428 = vshll.u32 %v424, 16
        %v429 = vshrl.u32 %v424, 16
        %vm430 = vc.u32 %v422, %v426
        %v431 = vsel %vm430, 1, 0
        %v432 = vadd.s32 %v422, %v426
        %v433 = vadd.s32 %v425, %v431
        %vm434 = vc.u32 %v432, %v428
        %v435 = vsel %vm434, 1, 0
        %v436 = vadd.s32 %v432, %v428
        %v437 = vadd.s32 %v433, %v435
        %v438 = vadd.s32 %v437, %v427
        %v439 = vadd.s32 %v438, %v429
        %v440 = vand.u32 %v417, 65535
        %v441 = vshrl.u32 %v417, 16
        %v442 = vand.u32 %v412, 65535
        %v443 = vshrl.u32 %v412, 16
        %v444 = vmul.u32 %v440, %v442
        %v445 = vmul.u32 %v440, %v443
        %v446 = vmul.u32 %v441, %v442
        %v447 = vmul.u32 %v441, %v443
        %v448 = vshll.u32 %v445, 16
        %v449 = vshrl.u32 %v445, 16
        %v450 = vshll.u32 %v446, 16
        %v451 = vshrl.u32 %v446, 16
        %vm452 = vc.u32 %v444, %v448
        %v453 = vsel %vm452, 1, 0
        %v454 = vadd.s32 %v444, %v448
        %v455 = vadd.s32 %v447, %v453
        %vm456 = vc.u32 %v454, %v450
        %v457 = vsel %vm456, 1, 0
        %v458 = vadd.s32 %v454, %v450
        %v459 = vadd.s32 %v455, %v457
        %v460 = vadd.s32 %v459, %v449
        %v461 = vadd.s32 %v460, %v451
        %v462 = vmul.u32 %v417, %v408
        %v463 = vadd.s32 %v439, %v458
        %vm464 = vc.u32 %v439, %v458
        %v465 = vadd.s32 %v461, 1
        %v466 = vsel %vm464, %v465, %v461
        %v467 = vadd.s32 %v462, %v466
        %v468 = vadd.s32 %v467, 536870912
        %v469 = vshrl.u32 %v468, 30
        %v470 = vshll.u32 %v469, 30
        %v471 = vsub.s32 %v467, %v470
        %vm472 = vcmp.lt.s32.totalorder %v471, 0
        %v473 = vsub.s32 0, %v471
        %v474 = vsel %vm472, %v473, %v471
        %v475 = vclz %v474
        %v476 = vsub.s32 %v475, 2
        %vm477 = vcmp.gt.s32.totalorder 0, %v476
        %v478 = vsel %vm477, 0, %v476
        %v479 = vsub.s32 32, %v478
        %v480 = vshll.u32 %v471, %v478
        %v481 = vshrl.u32 %v463, %v479
        %v482 = vor.u32 %v480, %v481
        %v483 = vsub.s32 4294967266, %v478
        %v484 = vadd.s32 %v483, 127
        %v485 = vshll.u32 %v484, 23
        %v486 = vor.u32 4788187, %v485
        %v487 = vand.u32 2147483647, %v486
        %v489 = vcvt.s32.f32 %v482
        %v490 = vmul.f32 %v489, %v487
        %v491 = vxor.u32 %v490, 2147483648
        %v492 = vsel %vm371, %v491, %v490
        %v493 = vsub.s32 4, %v469
        %v494 = vsel %vm371, %v493, %v469
        %v495 = vsel %vm370, %v367, %v492
        %v496 = vsel %vm370, 0, %v494
        %v497 = vmul.f32 %v495, %v495
        %v498 = vmul.f32 %v497, -0.001358992
        %v499 = vadd.f32 %v498, 0.041655596
        %v500 = vmul.f32 %v497, %v499
        %v501 = vadd.f32 %v500, -0.4999988
        %v502 = vmul.f32 %v497, %v501
        %v503 = vadd.f32 1.0, %v502
        %v504 = vmul.f32 %v495, %v495
        %v505 = vmul.f32 %v504, -0.00019511016
        %v506 = vadd.f32 %v505, 0.008332121
        %v507 = vmul.f32 %v504, %v506
        %v508 = vadd.f32 %v507, -0.16666654
        %v509 = vmul.f32 %v504, %v508
        %v510 = vadd.f32 %v509, 1.0
        %v511 = vmul.f32 %v510, %v495
        %vm512 = vweird.f32 %v367
        %v513 = vand.u32 %v496, 3
        %vm514 = vcmp.lt.s32.totalorder %v513, 2
        %vm515 = vcmp.eq.s32.totalorder %v513, 0
        %v516 = vxor.u32 %v511, 2147483648
        %v517 = vsel %vm515, %v503, %v516
        %vm518 = vcmp.eq.s32.totalorder %v513, 2
        %v519 = vxor.u32 %v503, 2147483648
        %v520 = vsel %vm518, %v519, %v511
        %v521 = vsel %vm514, %v517, %v520
        %v522 = vsel %vm512, nan, %v521
        %v523 = vand.u32 2147483647, %v368
        %vm524 = vcmp.le.f32.partialorder %v523, 0.7853982
        %vm525 = vcmp.lt.s32.totalorder %v368, 0
        %v526 = vand.u32 %v368, 2139095040
        %v527 = vshrl.u32 %v526, 23
        %v528 = vsub.s32 %v527, 127
        %v529 = vand.u32 2147483647, %v368
        %v530 = vand.u32 %v529, 8388607
        %v531 = vor.u32 %v530, 8388608
        %v532 = vsub.s32 0, %v531
        %v533 = vadd.s32 %v528, 1
        %vm534 = vcmp.gt.s32.totalorder %v533, 0
        %v535 = vsel %vm534, %v533, 0
        %v536 = vshrl.u32 %v535, 5
        %v537 = vand.u32 %v535, 31
        %v538 = vsub.s32 32, %v537
        %v539 = vshrl.u32 683565275, %v538
        %v540 = vshll.u32 683565275, %v537
        %v541 = vshrl.u32 2475754826, %v538
        %v542 = vor.u32 %v540, %v541
        %v543 = vshll.u32 2475754826, %v537
        %v544 = vshrl.u32 2131351028, %v538
        %v545 = vor.u32 %v543, %v544
        %v546 = vshll.u32 2131351028, %v537
        %v547 = vshrl.u32 2102212464, %v538
        %v548 = vor.u32 %v546, %v547
        %v549 = vshll.u32 2102212464, %v537
        %v550 = vshrl.u32 920167782, %v538
        %v551 = vor.u32 %v549, %v550
        %v552 = vshll.u32 920167782, %v537
        %v553 = vshrl.u32 1326507024, %v538
        %v554 = vor.u32 %v552, %v553
        %vm555 = vcmp.lt.s32.totalorder %v536, 1
        %vm556 = vcmp.lt.s32.totalorder %v536, 2
        %vm557 = vcmp.lt.s32.totalorder %v536, 3
        %vm558 = vcmp.lt.s32.totalorder %v536, 4
        %v559 = vsel %vm555, %v539, %v542
        %v560 = vsel %vm558, %v548, 2102212464
        %v561 = vsel %vm557, %v545, %v560
        %v562 = vsel %vm556, %v559, %v561
        %v563 = vsel %vm555, %v542, %v545
        %v564 = vsel %vm558, %v551, 920167782
        %v565 = vsel %vm557, %v548, %v564
        %v566 = vsel %vm556, %v563, %v565
        %v567 = vsel %vm555, %v545, %v548
        %v568 = vsel %vm558, %v554, 1326507024
        %v569 = vsel %vm557, %v551, %v568
        %v570 = vsel %vm556, %v567, %v569
        %v571 = vshll.u32 %v531, 8
        %v572 = vand.u32 %v571, 65535
        %v573 = vshrl.u32 %v571, 16
        %v574 = vand.u32 %v570, 65535
        %v575 = vshrl.u32 %v570, 16
        %v576 = vmul.u32 %v572, %v574
        %v577 = vmul.u32 %v572, %v575
        %v578 = vmul.u32 %v573, %v574
        %v579 = vmul.u32 %v573, %v575
        %v580 = vshll.u32 %v577, 16
        %v581 = vshrl.u32 %v577, 16
        %v582 = vshll.u32 %v578, 16
        %v583 = vshrl.u32 %v578, 16
        %vm584 = vc.u32 %v576, %v580
        %v585 = vsel %vm584, 1, 0
        %v586 = vadd.s32 %v576, %v580
        %v587 = vadd.s32 %v579, %v585
        %vm588 = vc.u32 %v586, %v582
        %v589 = vsel %vm588, 1, 0
        %v590 = vadd.s32 %v586, %v582
        %v591 = vadd.s32 %v587, %v589
        %v592 = vadd.s32 %v591, %v581
        %v593 = vadd.s32 %v592, %v583
        %v594 = vand.u32 %v571, 65535
        %v595 = vshrl.u32 %v571, 16
        %v596 = vand.u32 %v566, 65535
        %v597 = vshrl.u32 %v566, 16
        %v598 = vmul.u32 %v594, %v596
        %v599 = vmul.u32 %v594, %v597
        %v600 = vmul.u32 %v595, %v596
        %v601 = vmul.u32 %v595, %v597
        %v602 = vshll.u32 %v599, 16
        %v603 = vshrl.u32 %v599, 16
        %v604 = vshll.u32 %v600, 16
        %v605 = vshrl.u32 %v600, 16
        %vm606 = vc.u32 %v598, %v602
        %v607 = vsel %vm606, 1, 0
        %v608 = vadd.s32 %v598, %v602
        %v609 = vadd.s32 %v601, %v607
        %vm610 = vc.u32 %v608, %v604
        %v611 = vsel %vm610, 1, 0
        %v612 = vadd.s32 %v608, %v604
        %v613 = vadd.s32 %v609, %v611
        %v614 = vadd.s32 %v613, %v603
        %v615 = vadd.s32 %v614, %v605
        %v616 = vmul.u32 %v571, %v562
        %v617 = vadd.s32 %v593, %v612
        %vm618 = vc.u32 %v593, %v612
        %v619 = vadd.s32 %v615, 1
        %v620 = vsel %vm618, %v619, %v615
        %v621 = vadd.s32 %v616, %v620
        %v622 = vadd.s32 %v621, 536870912
        %v623 = vshrl.u32 %v622, 30
        %v624 = vshll.u32 %v623, 30
        %v625 = vsub.s32 %v621, %v624
        %vm626 = vcmp.lt.s32.totalorder %v625, 0
        %v627 = vsub.s32 0, %v625
        %v628 = vsel %vm626, %v627, %v625
        %v629 = vclz %v628
        %v630 = vsub.s32 %v629, 2
        %vm631 = vcmp.gt.s32.totalorder 0, %v630
        %v632 = vsel %vm631, 0, %v630
        %v633 = vsub.s32 32, %v632
        %v634 = vshll.u32 %v625, %v632
        %v635 = vshrl.u32 %v617, %v633
        %v636 = vor.u32 %v634, %v635
        %v637 = vsub.s32 4294967266, %v632
        %v638 = vadd.s32 %v637, 127
        %v639 = vshll.u32 %v638, 23
        %v640 = vor.u32 4788187, %v639
        %v641 = vand.u32 2147483647, %v640
        %v643 = vcvt.s32.f32 %v636
        %v644 = vmul.f32 %v643, %v641
        %v645 = vxor.u32 %v644, 2147483648
        %v646 = vsel %vm525, %v645, %v644
        %v647 = vsub.s32 4, %v623
        %v648 = vsel %vm525, %v647, %v623
        %v649 = vsel %vm524, %v368, %v646
        %v650 = vsel %vm524, 0, %v648
        %v651 = vmul.f32 %v649, %v649
        %v652 = vmul.f32 %v651, -0.001358992
        %v653 = vadd.f32 %v652, 0.041655596
        %v654 = vmul.f32 %v651, %v653
        %v655 = vadd.f32 %v654, -0.4999988
        %v656 = vmul.f32 %v651, %v655
        %v657 = vadd.f32 1.0, %v656
        %v658 = vmul.f32 %v649, %v649
        %v659 = vmul.f32 %v658, -0.00019511016
        %v660 = vadd.f32 %v659, 0.008332121
        %v661 = vmul.f32 %v658, %v660
        %v662 = vadd.f32 %v661, -0.16666654
        %v663 = vmul.f32 %v658, %v662
        %v664 = vadd.f32 %v663, 1.0
        %v665 = vmul.f32 %v664, %v649
        %vm666 = vweird.f32 %v368
        %v667 = vand.u32 %v650, 3
        %vm668 = vcmp.lt.s32.totalorder %v667, 2
        %vm669 = vcmp.eq.s32.totalorder %v667, 0
        %v670 = vxor.u32 %v665, 2147483648
        %v671 = vsel %vm669, %v657, %v670
        %vm672 = vcmp.eq.s32.totalorder %v667, 2
        %v673 = vxor.u32 %v657, 2147483648
        %v674 = vsel %vm672, %v673, %v665
        %v675 = vsel %vm668, %v671, %v674
        %v676 = vsel %vm666, nan, %v675
        %v677 = vand.u32 2147483647, %v367
        %vm678 = vcmp.le.f32.partialorder %v677, 0.7853982
        %vm679 = vcmp.lt.s32.totalorder %v367, 0
        %v680 = vand.u32 %v367, 2139095040
        %v681 = vshrl.u32 %v680, 23
        %v682 = vsub.s32 %v681, 127
        %v683 = vand.u32 2147483647, %v367
        %v684 = vand.u32 %v683, 8388607
        %v685 = vor.u32 %v684, 8388608
        %v686 = vsub.s32 0, %v685
        %v687 = vadd.s32 %v682, 1
        %vm688 = vcmp.gt.s32.totalorder %v687, 0
        %v689 = vsel %vm688, %v687, 0
        %v690 = vshrl.u32 %v689, 5
        %v691 = vand.u32 %v689, 31
        %v692 = vsub.s32 32, %v691
        %v693 = vshrl.u32 683565275, %v692
        %v694 = vshll.u32 683565275, %v691
        %v695 = vshrl.u32 2475754826, %v692
        %v696 = vor.u32 %v694, %v695
        %v697 = vshll.u32 2475754826, %v691
        %v698 = vshrl.u32 2131351028, %v692
        %v699 = vor.u32 %v697, %v698
        %v700 = vshll.u32 2131351028, %v691
        %v701 = vshrl.u32 2102212464, %v692
        %v702 = vor.u32 %v700, %v701
        %v703 = vshll.u32 2102212464, %v691
        %v704 = vshrl.u32 920167782, %v692
        %v705 = vor.u32 %v703, %v704
        %v706 = vshll.u32 920167782, %v691
        %v707 = vshrl.u32 1326507024, %v692
        %v708 = vor.u32 %v706, %v707
        %vm709 = vcmp.lt.s32.totalorder %v690, 1
        %vm710 = vcmp.lt.s32.totalorder %v690, 2
        %vm711 = vcmp.lt.s32.totalorder %v690, 3
        %vm712 = vcmp.lt.s32.totalorder %v690, 4
        %v713 = vsel %vm709, %v693, %v696
        %v714 = vsel %vm712, %v702, 2102212464
        %v715 = vsel %vm711, %v699, %v714
        %v716 = vsel %vm710, %v713, %v715
        %v717 = vsel %vm709, %v696, %v699
        %v718 = vsel %vm712, %v705, 920167782
        %v719 = vsel %vm711, %v702, %v718
        %v720 = vsel %vm710, %v717, %v719
        %v721 = vsel %vm709, %v699, %v702
        %v722 = vsel %vm712, %v708, 1326507024
        %v723 = vsel %vm711, %v705, %v722
        %v724 = vsel %vm710, %v721, %v723
        %v725 = vshll.u32 %v685, 8
        %v726 = vand.u32 %v725, 65535
        %v727 = vshrl.u32 %v725, 16
        %v728 = vand.u32 %v724, 65535
        %v729 = vshrl.u32 %v724, 16
        %v730 = vmul.u32 %v726, %v728
        %v731 = vmul.u32 %v726, %v729
        %v732 = vmul.u32 %v727, %v728
        %v733 = vmul.u32 %v727, %v729
        %v734 = vshll.u32 %v731, 16
        %v735 = vshrl.u32 %v731, 16
        %v736 = vshll.u32 %v732, 16
        %v737 = vshrl.u32 %v732, 16
        %vm738 = vc.u32 %v730, %v734
        %v739 = vsel %vm738, 1, 0
        %v740 = vadd.s32 %v730, %v734
        %v741 = vadd.s32 %v733, %v739
        %vm742 = vc.u32 %v740, %v736
        %v743 = vsel %vm742, 1, 0
        %v744 = vadd.s32 %v740, %v736
        %v745 = vadd.s32 %v741, %v743
        %v746 = vadd.s32 %v745, %v735
        %v747 = vadd.s32 %v746, %v737
        %v748 = vand.u32 %v725, 65535
        %v749 = vshrl.u32 %v725, 16
        %v750 = vand.u32 %v720, 65535
        %v751 = vshrl.u32 %v720, 16
        %v752 = vmul.u32 %v748, %v750
        %v753 = vmul.u32 %v748, %v751
        %v754 = vmul.u32 %v749, %v750
        %v755 = vmul.u32 %v749, %v751
        %v756 = vshll.u32 %v753, 16
        %v757 = vshrl.u32 %v753, 16
        %v758 = vshll.u32 %v754, 16
        %v759 = vshrl.u32 %v754, 16
        %vm760 = vc.u32 %v752, %v756
        %v761 = vsel %vm760, 1, 0
        %v762 = vadd.s32 %v752, %v756
        %v763 = vadd.s32 %v755, %v761
        %vm764 = vc.u32 %v762, %v758
        %v765 = vsel %vm764, 1, 0
        %v766 = vadd.s32 %v762, %v758
        %v767 = vadd.s32 %v763, %v765
        %v768 = vadd.s32 %v767, %v757
        %v769 = vadd.s32 %v768, %v759
        %v770 = vmul.u32 %v725, %v716
        %v771 = vadd.s32 %v747, %v766
        %vm772 = vc.u32 %v747, %v766
        %v773 = vadd.s32 %v769, 1
        %v774 = vsel %vm772, %v773, %v769
        %v775 = vadd.s32 %v770, %v774
        %v776 = vadd.s32 %v775, 536870912
        %v777 = vshrl.u32 %v776, 30
        %v778 = vshll.u32 %v777, 30
        %v779 = vsub.s32 %v775, %v778
        %vm780 = vcmp.lt.s32.totalorder %v779, 0
        %v781 = vsub.s32 0, %v779
        %v782 = vsel %vm780, %v781, %v779
        %v783 = vclz %v782
        %v784 = vsub.s32 %v783, 2
        %vm785 = vcmp.gt.s32.totalorder 0, %v784
        %v786 = vsel %vm785, 0, %v784
        %v787 = vsub.s32 32, %v786
        %v788 = vshll.u32 %v779, %v786
        %v789 = vshrl.u32 %v771, %v787
        %v790 = vor.u32 %v788, %v789
        %v791 = vsub.s32 4294967266, %v786
        %v792 = vadd.s32 %v791, 127
        %v793 = vshll.u32 %v792, 23
        %v794 = vor.u32 4788187, %v793
        %v795 = vand.u32 2147483647, %v794
        %v797 = vcvt.s32.f32 %v790
        %v798 = vmul.f32 %v797, %v795
        %v799 = vxor.u32 %v798, 2147483648
        %v800 = vsel %vm679, %v799, %v798
        %v801 = vsub.s32 4, %v777
        %v802 = vsel %vm679, %v801, %v777
        %v803 = vsel %vm678, %v367, %v800
        %v804 = vsel %vm678, 0, %v802
        %v805 = vmul.f32 %v803, %v803
        %v806 = vmul.f32 %v805, -0.001358992
        %v807 = vadd.f32 %v806, 0.041655596
        %v808 = vmul.f32 %v805, %v807
        %v809 = vadd.f32 %v808, -0.4999988
        %v810 = vmul.f32 %v805, %v809
        %v811 = vadd.f32 1.0, %v810
        %v812 = vmul.f32 %v803, %v803
        %v813 = vmul.f32 %v812, -0.00019511016
        %v814 = vadd.f32 %v813, 0.008332121
        %v815 = vmul.f32 %v812, %v814
        %v816 = vadd.f32 %v815, -0.16666654
        %v817 = vmul.f32 %v812, %v816
        %v818 = vadd.f32 %v817, 1.0
        %v819 = vmul.f32 %v818, %v803
        %vm820 = vweird.f32 %v367
        %v821 = vadd.s32 %v804, 3
        %v822 = vand.u32 %v821, 3
        %vm823 = vcmp.lt.s32.totalorder %v822, 2
        %vm824 = vcmp.eq.s32.totalorder %v822, 0
        %v825 = vxor.u32 %v819, 2147483648
        %v826 = vsel %vm824, %v811, %v825
        %vm827 = vcmp.eq.s32.totalorder %v822, 2
        %v828 = vxor.u32 %v811, 2147483648
        %v829 = vsel %vm827, %v828, %v819
        %v830 = vsel %vm823, %v826, %v829
        %v831 = vsel %vm820, nan, %v830
        %v832 = vand.u32 2147483647, %v368
        %vm833 = vcmp.le.f32.partialorder %v832, 0.7853982
        %vm834 = vcmp.lt.s32.totalorder %v368, 0
        %v835 = vand.u32 %v368, 2139095040
        %v836 = vshrl.u32 %v835, 23
        %v837 = vsub.s32 %v836, 127
        %v838 = vand.u32 2147483647, %v368
        %v839 = vand.u32 %v838, 8388607
        %v840 = vor.u32 %v839, 8388608
        %v841 = vsub.s32 0, %v840
        %v842 = vadd.s32 %v837, 1
        %vm843 = vcmp.gt.s32.totalorder %v842, 0
        %v844 = vsel %vm843, %v842, 0
        %v845 = vshrl.u32 %v844, 5
        %v846 = vand.u32 %v844, 31
        %v847 = vsub.s32 32, %v846
        %v848 = vshrl.u32 683565275, %v847
        %v849 = vshll.u32 683565275, %v846
        %v850 = vshrl.u32 2475754826, %v847
        %v851 = vor.u32 %v849, %v850
        %v852 = vshll.u32 2475754826, %v846
        %v853 = vshrl.u32 2131351028, %v847
        %v854 = vor.u32 %v852, %v853
        %v855 = vshll.u32 2131351028, %v846
        %v856 = vshrl.u32 2102212464, %v847
        %v857 = vor.u32 %v855, %v856
        %v858 = vshll.u32 2102212464, %v846
        %v859 = vshrl.u32 920167782, %v847
        %v860 = vor.u32 %v858, %v859
        %v861 = vshll.u32 920167782, %v846
        %v862 = vshrl.u32 1326507024, %v847
        %v863 = vor.u32 %v861, %v862
        %vm864 = vcmp.lt.s32.totalorder %v845, 1
        %vm865 = vcmp.lt.s32.totalorder %v845, 2
        %vm866 = vcmp.lt.s32.totalorder %v845, 3
        %vm867 = vcmp.lt.s32.totalorder %v845, 4
        %v868 = vsel %vm864, %v848, %v851
        %v869 = vsel %vm867, %v857, 2102212464
        %v870 = vsel %vm866, %v854, %v869
        %v871 = vsel %vm865, %v868, %v870
        %v872 = vsel %vm864, %v851, %v854
        %v873 = vsel %vm867, %v860, 920167782
        %v874 = vsel %vm866, %v857, %v873
        %v875 = vsel %vm865, %v872, %v874
        %v876 = vsel %vm864, %v854, %v857
        %v877 = vsel %vm867, %v863, 1326507024
        %v878 = vsel %vm866, %v860, %v877
        %v879 = vsel %vm865, %v876, %v878
        %v880 = vshll.u32 %v840, 8
        %v881 = vand.u32 %v880, 65535
        %v882 = vshrl.u32 %v880, 16
        %v883 = vand.u32 %v879, 65535
        %v884 = vshrl.u32 %v879, 16
        %v885 = vmul.u32 %v881, %v883
        %v886 = vmul.u32 %v881, %v884
        %v887 = vmul.u32 %v882, %v883
        %v888 = vmul.u32 %v882, %v884
        %v889 = vshll.u32 %v886, 16
        %v890 = vshrl.u32 %v886, 16
        %v891 = vshll.u32 %v887, 16
        %v892 = vshrl.u32 %v887, 16
        %vm893 = vc.u32 %v885, %v889
        %v894 = vsel %vm893, 1, 0
        %v895 = vadd.s32 %v885, %v889
        %v896 = vadd.s32 %v888, %v894
        %vm897 = vc.u32 %v895, %v891
        %v898 = vsel %vm897, 1, 0
        %v899 = vadd.s32 %v895, %v891
        %v900 = vadd.s32 %v896, %v898
        %v901 = vadd.s32 %v900, %v890
        %v902 = vadd.s32 %v901, %v892
        %v903 = vand.u32 %v880, 65535
        %v904 = vshrl.u32 %v880, 16
        %v905 = vand.u32 %v875, 65535
        %v906 = vshrl.u32 %v875, 16
        %v907 = vmul.u32 %v903, %v905
        %v908 = vmul.u32 %v903, %v906
        %v909 = vmul.u32 %v904, %v905
        %v910 = vmul.u32 %v904, %v906
        %v911 = vshll.u32 %v908, 16
        %v912 = vshrl.u32 %v908, 16
        %v913 = vshll.u32 %v909, 16
        %v914 = vshrl.u32 %v909, 16
        %vm915 = vc.u32 %v907, %v911
        %v916 = vsel %vm915, 1, 0
        %v917 = vadd.s32 %v907, %v911
        %v918 = vadd.s32 %v910, %v916
        %vm919 = vc.u32 %v917, %v913
        %v920 = vsel %vm919, 1, 0
        %v921 = vadd.s32 %v917, %v913
        %v922 = vadd.s32 %v918, %v920
        %v923 = vadd.s32 %v922, %v912
        %v924 = vadd.s32 %v923, %v914
        %v925 = vmul.u32 %v880, %v871
        %v926 = vadd.s32 %v902, %v921
        %vm927 = vc.u32 %v902, %v921
        %v928 = vadd.s32 %v924, 1
        %v929 = vsel %vm927, %v928, %v924
        %v930 = vadd.s32 %v925, %v929
        %v931 = vadd.s32 %v930, 536870912
        %v932 = vshrl.u32 %v931, 30
        %v933 = vshll.u32 %v932, 30
        %v934 = vsub.s32 %v930, %v933
        %vm935 = vcmp.lt.s32.totalorder %v934, 0
        %v936 = vsub.s32 0, %v934
        %v937 = vsel %vm935, %v936, %v934
        %v938 = vclz %v937
        %v939 = vsub.s32 %v938, 2
        %vm940 = vcmp.gt.s32.totalorder 0, %v939
        %v941 = vsel %vm940, 0, %v939
        %v942 = vsub.s32 32, %v941
        %v943 = vshll.u32 %v934, %v941
        %v944 = vshrl.u32 %v926, %v942
        %v945 = vor.u32 %v943, %v944
        %v946 = vsub.s32 4294967266, %v941
        %v947 = vadd.s32 %v946, 127
        %v948 = vshll.u32 %v947, 23
        %v949 = vor.u32 4788187, %v948
        %v950 = vand.u32 2147483647, %v949
        %v952 = vcvt.s32.f32 %v945
        %v953 = vmul.f32 %v952, %v950
        %v954 = vxor.u32 %v953, 2147483648
        %v955 = vsel %vm834, %v954, %v953
        %v956 = vsub.s32 4, %v932
        %v957 = vsel %vm834, %v956, %v932
        %v958 = vsel %vm833, %v368, %v955
        %v959 = vsel %vm833, 0, %v957
        %v960 = vmul.f32 %v958, %v958
        %v961 = vmul.f32 %v960, -0.001358992
        %v962 = vadd.f32 %v961, 0.041655596
        %v963 = vmul.f32 %v960, %v962
        %v964 = vadd.f32 %v963, -0.4999988
        %v965 = vmul.f32 %v960, %v964
        %v966 = vadd.f32 1.0, %v965
        %v967 = vmul.f32 %v958, %v958
        %v968 = vmul.f32 %v967, -0.00019511016
        %v969 = vadd.f32 %v968, 0.008332121
        %v970 = vmul.f32 %v967, %v969
        %v971 = vadd.f32 %v970, -0.16666654
        %v972 = vmul.f32 %v967, %v971
        %v973 = vadd.f32 %v972, 1.0
        %v974 = vmul.f32 %v973, %v958
        %vm975 = vweird.f32 %v368
        %v976 = vadd.s32 %v959, 3
        %v977 = vand.u32 %v976, 3
        %vm978 = vcmp.lt.s32.totalorder %v977, 2
        %vm979 = vcmp.eq.s32.totalorder %v977, 0
        %v980 = vxor.u32 %v974, 2147483648
        %v981 = vsel %vm979, %v966, %v980
        %vm982 = vcmp.eq.s32.totalorder %v977, 2
        %v983 = vxor.u32 %v966, 2147483648
        %v984 = vsel %vm982, %v983, %v974
        %v985 = vsel %vm978, %v981, %v984
        %v986 = vsel %vm975, nan, %v985
        %v987 = vlaneseq
        %v988 = vand.u32 %v987, 127
        %v989 = vand.u32 %v988, 1
        %vm990 = vcmp.eq.s32.totalorder %v989, 0
        %v991 = vsub.f32 0.0, %v831
        %v992 = vsub.f32 0.0, %v986
        %v993 = vsel %vm990, %v991, %v831
        %v994 = vsel %vm990, %v992, %v986
        %v995 = vld [vmem:[%s346] sm:$0xff]
        %v996 = vld [vmem:[%s346 + $0x8] sm:$0xff]
        %v997 = vld [vmem:[%s277] sm:$0xff]
        %v998 = vld [vmem:[%s277 + $0x8] sm:$0xff]
        %v999 = vmul.f32 %v995, %v522
        %v1000 = vmul.f32 %v996, %v676
        %1001 = vrot.lane.b32.xlu0 %v995, 1
        %v1002 = vpop.permute.xlu0 %1001
        %1003 = vrot.lane.b32.xlu0 %v996, 1
        %v1004 = vpop.permute.xlu0 %1003
        %1005 = vrot.lane.b32.xlu0 %v995, 127
        %v1006 = vpop.permute.xlu0 %1005
        %1007 = vrot.lane.b32.xlu0 %v996, 127
        %v1008 = vpop.permute.xlu0 %1007
        %v1009 = vsel %vm990, %v1006, %v1002
        %v1010 = vsel %vm990, %v1008, %v1004
        %v1011 = vmul.f32 %v1009, %v993
        %v1012 = vmul.f32 %v1010, %v994
        %v1013 = vadd.f32 %v999, %v1011
        %v1014 = vadd.f32 %v1000, %v1012
        %1015 = vst [vmem:[%s320] sm:$0xff] %v1013
        %1016 = vst [vmem:[%s320 + $0x8] sm:$0xff] %v1014
        %v1017 = vmul.f32 %v997, %v522
        %v1018 = vmul.f32 %v998, %v676
        %1019 = vrot.lane.b32.xlu0 %v997, 1
        %v1020 = vpop.permute.xlu0 %1019
        %1021 = vrot.lane.b32.xlu0 %v998, 1
        %v1022 = vpop.permute.xlu0 %1021
        %1023 = vrot.lane.b32.xlu0 %v997, 127
        %v1024 = vpop.permute.xlu0 %1023
        %1025 = vrot.lane.b32.xlu0 %v998, 127
        %v1026 = vpop.permute.xlu0 %1025
        %v1027 = vsel %vm990, %v1024, %v1020
        %v1028 = vsel %vm990, %v1026, %v1022
        %v1029 = vmul.f32 %v1027, %v993
        %v1030 = vmul.f32 %v1028, %v994
        %v1031 = vadd.f32 %v1017, %v1029
        %v1032 = vadd.f32 %v1018, %v1030
        %1033 = vst [vmem:[%s327] sm:$0xff] %v1031
        %1034 = vst [vmem:[%s327 + $0x8] sm:$0xff] %v1032
        %s1035 = sand.u32 %s153, 1
        %s1036 = scalar_lea.sflag [#allocation4], %s1035
        %s1037 = sand.u32 %s153, 1
        %s1038 = smul.addr %s1037, 16
        %s1039 = scalar_lea.vmem [#allocation5], %s1038
        %s1040 = sand.u32 %s181, 1
        %s1041 = scalar_lea.sflag [#allocation7], %s1040
        %s1042 = sand.u32 %s181, 1
        %s1043 = smul.addr %s1042, 16
        %s1044 = scalar_lea.vmem [#allocation6], %s1043
        // Predicated region
        $region41: #{tpu_custom_call.1} parent=35 // pred_check
          %p1045 = pneg %p163
        $region42: #{tpu_custom_call.1} parent=35 // pred_check_branch
          %1047 = sbr.rel (%p1045) target = $region44
        $region43: #{tpu_custom_call.1} parent=35 // pred_region
          %s1048 = smul.u32 2, %s31
          %1050 = vsyncadd %s1036, 0
          %s1051 = smul.addr %s30, 2
          %s1052 = sadd.s32 %s1048, %s1051
          %s1053 = smul.addr %s1052, 8
          %s1054 = scalar_lea.hbm %s4, %s1053
          %s1055 = sshll.u32 %s1039, 4
          %s1056 = int_to_ptr.vmem [resolvable:$true] %s1055
          %s1057 = sshll.u32 %s1054, 4
          %s1058 = int_to_ptr.hbm [resolvable:$true] %s1057
          %1063 = dma.vmem_to_hbm [thread:$0]  %s1056, 256, %s1058, %s1036, 128, 128, 8
        $region44: #{tpu_custom_call.1} parent=35 // pred_fallthru
          _
        // Predicated region
        $region45: #{tpu_custom_call.1} parent=35 // pred_check
          %p1064 = pneg %p191
        $region46: #{tpu_custom_call.1} parent=35 // pred_check_branch
          %1066 = sbr.rel (%p1064) target = $region48
        $region47: #{tpu_custom_call.1} parent=35 // pred_region
          %s1067 = smul.u32 2, %s31
          %1069 = vsyncadd %s1041, 0
          %s1070 = smul.addr %s30, 2
          %s1071 = sadd.s32 %s1067, %s1070
          %s1072 = smul.addr %s1071, 8
          %s1073 = scalar_lea.hbm %s5, %s1072
          %s1074 = sshll.u32 %s1044, 4
          %s1075 = int_to_ptr.vmem [resolvable:$true] %s1074
          %s1076 = sshll.u32 %s1073, 4
          %s1077 = int_to_ptr.hbm [resolvable:$true] %s1076
          %1082 = dma.vmem_to_hbm [thread:$0]  %s1075, 256, %s1077, %s1041, 128, 128, 8
        $region48: #{tpu_custom_call.1} parent=35 // pred_fallthru
          _
      $region36: #{tpu_custom_call.1} parent=5 // pred_fallthru
        _
      %p1083 = scmp.le.s32.totalorder 2, %s21
      // Predicated region
      $region49: #{tpu_custom_call.1} parent=5 // pred_check
        %p1084 = pneg %p1083
      $region50: #{tpu_custom_call.1} parent=5 // pred_check_branch
        %1086 = sbr.rel (%p1084) target = $region52
      $region51: #{tpu_custom_call.1} parent=5 // pred_region
        %s1087 = ssub.s32 %s21, 2
        // Predicated region
        $region53: #{tpu_custom_call.1} parent=51 // pred_check
          %p1088 = pneg %p169
        $region54: #{tpu_custom_call.1} parent=51 // pred_check_branch
          %1090 = sbr.rel (%p1088) target = $region56
        $region55: #{tpu_custom_call.1} parent=51 // pred_region
          %s1091 = sand.u32 %s154, 1
          %s1092 = scalar_lea.sflag [#allocation4], %s1091
          %s1093 = sand.u32 %s154, 1
          %s1094 = smul.addr %s1093, 16
          %s1095 = scalar_lea.vmem [#allocation5], %s1094
          %1097 = dma.done %s1092, 256
        $region56: #{tpu_custom_call.1} parent=51 // pred_fallthru
          _
        // Predicated region
        $region57: #{tpu_custom_call.1} parent=51 // pred_check
          %p1098 = pneg %p197
        $region58: #{tpu_custom_call.1} parent=51 // pred_check_branch
          %1100 = sbr.rel (%p1098) target = $region60
        $region59: #{tpu_custom_call.1} parent=51 // pred_region
          %s1101 = sand.u32 %s182, 1
          %s1102 = scalar_lea.sflag [#allocation7], %s1101
          %s1103 = sand.u32 %s182, 1
          %s1104 = smul.addr %s1103, 16
          %s1105 = scalar_lea.vmem [#allocation6], %s1104
          %1107 = dma.done %s1102, 256
        $region60: #{tpu_custom_call.1} parent=51 // pred_fallthru
          _
      $region52: #{tpu_custom_call.1} parent=5 // pred_fallthru
        _
    $region6: #{tpu_custom_call.1} parent=1 // loop_footer
      %s25 = sadd.s32 1, %s21
    $region7: #{tpu_custom_call.1} parent=1 // loop_footer_branch
      %20 = sbr.rel target = $region3
    $region8: #{tpu_custom_call.1} parent=1 // loop_exit
      _
    %1108 = vsyncpa [#allocation3], 1
    %s1109 = scalar_lea.sflag [#allocation3], 1
    %1110 = vsyncpa %s1109, 1
    %1111 = vsyncpa [#allocation4], 1
    %s1112 = scalar_lea.sflag [#allocation4], 1
    %1113 = vsyncpa %s1112, 1
    %1114 = vsyncpa [#allocation7], 1
    %s1115 = scalar_lea.sflag [#allocation7], 1
    %1116 = vsyncpa %s1115, 1

</llo_original>
